<compile_context>
chip_gen: v7x
topology: tpu7x:2x2x1
jax: 0.10.0
libtpu: 0.0.40
codegen_flags: <defaults>
</compile_context>

<pallas_src>
import jax
import jax.numpy as jnp
from jax.experimental import pallas as pl
from jax.experimental.pallas import tpu as pltpu

COMPRESS_C = 8
BN_EPS = 1e-3  # ultralytics Conv BatchNorm2d eps


def _round_up(x, m):
    return ((x + m - 1) // m) * m


# ----------------------------- Pallas kernel -----------------------------
def asff_two_kernel(x1_ref, x2_ref,
                    w1_ref, b1_ref,
                    w2_ref, b2_ref,
                    wl1_ref, wl2_ref, bl_ref,
                    wc_ref, bc_ref,
                    o_ref):
    # x*_ref blocks are (C, T): channels on sublane, pixels on lane.
    x1 = x1_ref[...]
    x2 = x2_ref[...]

    # weight_level_k : 1x1 conv (BN folded) + ReLU  ->  (compress_c, T)
    l1 = jnp.maximum(
        jnp.dot(w1_ref[...], x1, preferred_element_type=jnp.float32) + b1_ref[...], 0.0)
    l2 = jnp.maximum(
        jnp.dot(w2_ref[...], x2, preferred_element_type=jnp.float32) + b2_ref[...], 0.0)

    # weight_levels : Conv2d(2*compress_c, 2, 1, bias=True) on the channel
    # concat of (l1, l2), done as a split matmul (no in-kernel concat):
    #   Wl @ [l1; l2] == Wl1 @ l1 + Wl2 @ l2
    logits = (jnp.dot(wl1_ref[...], l1, preferred_element_type=jnp.float32)
              + jnp.dot(wl2_ref[...], l2, preferred_element_type=jnp.float32)
              + bl_ref[...])                                     # (2, T)

    # Stable 2-way softmax over the level axis, written elementwise.
    a = logits[0:1, :]                                           # (1, T)
    b = logits[1:2, :]                                           # (1, T)
    m = jnp.maximum(a, b)
    ea = jnp.exp(a - m)
    eb = jnp.exp(b - m)
    inv = pl.reciprocal(ea + eb)
    wa = ea * inv
    wb = eb * inv

    # Weighted fusion of the two inputs (full-lane-width VPU ops).
    fused = x1 * wa + x2 * wb                                    # (C, T)

    # Output Conv : 1x1 conv (BN folded) + ReLU  ->  (out_c, T)
    out = jnp.maximum(
        jnp.dot(wc_ref[...], fused, preferred_element_type=jnp.float32) + bc_ref[...],
        0.0)
    o_ref[...] = out.astype(o_ref.dtype)


# ------------------------------- Wrapper ---------------------------------
def asff_two_pallas(x1, x2, params, *, tile=1024):
    """x1, x2: NCHW float32. Returns NCHW float32 of shape (N, in_chans, H, W)."""
    n, c, h, w_sp = x1.shape
    out_c = params["wc"].shape[0]
    hw = h * w_sp

    # Free reshapes (no transposes): NCHW -> (N, C, H*W).
    x1p = x1.reshape(n, c, hw)
    x2p = x2.reshape(n, c, hw)

    # Pick a lane-aligned pixel tile and pad the pixel axis if needed.
    hw_lane = _round_up(hw, 128)
    tile = max(128, min(int(tile), hw_lane))
    tile = (tile // 128) * 128
    hw_pad = _round_up(hw, tile)
    if hw_pad != hw:
        pad = hw_pad - hw
        x1p = jnp.pad(x1p, ((0, 0), (0, 0), (0, pad)))
        x2p = jnp.pad(x2p, ((0, 0), (0, 0), (0, pad)))

    grid = (n, hw_pad // tile)

    in_px = pl.BlockSpec((None, c, tile), lambda b, i: (b, 0, i))
    out_px = pl.BlockSpec((None, out_c, tile), lambda b, i: (b, 0, i))

    def full_spec(arr):
        return pl.BlockSpec(arr.shape, lambda b, i: (0,) * arr.ndim)

    # Pre-split the weight_levels kernel so the Pallas kernel never slices a
    # lane-narrow weight ref in VMEM.
    wl1 = params["wl"][:, :COMPRESS_C]
    wl2 = params["wl"][:, COMPRESS_C:2 * COMPRESS_C]

    weight_args = (params["w1"], params["b1"],
                   params["w2"], params["b2"],
                   wl1, wl2, params["bl"],
                   params["wc"], params["bc"])

    out = pl.pallas_call(
        asff_two_kernel,
        out_shape=jax.ShapeDtypeStruct((n, out_c, hw_pad), jnp.float32),
        grid_spec=pltpu.PrefetchScalarGridSpec(
            num_scalar_prefetch=0,
            grid=grid,
            in_specs=[in_px, in_px] + [full_spec(a) for a in weight_args],
            out_specs=out_px,
        ),
        compiler_params=pltpu.CompilerParams(
            dimension_semantics=("parallel", "parallel"),
            vmem_limit_bytes=64 * 1024 * 1024),
    )(x1p, x2p, *weight_args)

    # Slice off pixel padding, then free reshape back to NCHW.
    return out[:, :, :hw].reshape(n, out_c, h, w_sp)


# ----------------------- Parameter construction --------------------------
def fold_conv_bn(conv_w, gamma, beta, mean, var, eps=BN_EPS):
    """Fold Conv2d(1x1, no bias) + BatchNorm2d(eval) into (W, b) for W @ x + b.

    conv_w: (out_c, in_c) 1x1 conv weight (kernel dims squeezed).
    Returns W of shape (out_c, in_c) and b of shape (out_c, 1).
    """
    scale = gamma / jnp.sqrt(var + eps)            # (out_c,)
    w_eff = conv_w * scale[:, None]                # (out_c, in_c)
    b_eff = (beta - mean * scale)[:, None]         # (out_c, 1)
    return w_eff.astype(jnp.float32), b_eff.astype(jnp.float32)


def make_params(key, in_chans):
    cc = COMPRESS_C
    ks = jax.random.split(key, 8)

    def conv_bn_params(k_w, k_bn, cout, cin):
        conv_w = 0.1 * jax.random.normal(k_w, (cout, cin), jnp.float32)
        kb = jax.random.split(k_bn, 4)
        gamma = 1.0 + 0.1 * jax.random.normal(kb[0], (cout,), jnp.float32)
        beta = 0.1 * jax.random.normal(kb[1], (cout,), jnp.float32)
        mean = 0.1 * jax.random.normal(kb[2], (cout,), jnp.float32)
        var = jnp.abs(1.0 + 0.1 * jax.random.normal(kb[3], (cout,), jnp.float32))
        return fold_conv_bn(conv_w, gamma, beta, mean, var)

    w1, b1 = conv_bn_params(ks[0], ks[1], cc, in_chans)
    w2, b2 = conv_bn_params(ks[2], ks[3], cc, in_chans)

    # weight_levels: plain Conv2d(2*cc, 2, 1, bias=True)
    wl = 0.1 * jax.random.normal(ks[4], (2, 2 * cc), jnp.float32)   # (2, 2*cc)
    bl = 0.1 * jax.random.normal(ks[5], (2, 1), jnp.float32)

    # final conv: in_chans -> in_chans (Conv + BN + ReLU)
    wc, bc = conv_bn_params(ks[6], ks[7], in_chans, in_chans)

    return {"w1": w1, "b1": b1, "w2": w2, "b2": b2,
            "wl": wl, "bl": bl, "wc": wc, "bc": bc}


# --------------------------- Pure-JAX reference ---------------------------
def asff_two_ref(x1, x2, p):
    def conv1x1(x, w, b):  # x: NCHW, w: (out, in), b: (out, 1)
        return jnp.einsum("oc,nchw->nohw", w, x) + b.reshape(1, -1, 1, 1)

    l1 = jax.nn.relu(conv1x1(x1, p["w1"], p["b1"]))
    l2 = jax.nn.relu(conv1x1(x2, p["w2"], p["b2"]))
    levels = jnp.concatenate([l1, l2], axis=1)
    logits = conv1x1(levels, p["wl"], p["bl"])
    w = jax.nn.softmax(logits, axis=1)
    fused = x1 * w[:, 0:1] + x2 * w[:, 1:2]
    return jax.nn.relu(conv1x1(fused, p["wc"], p["bc"]))


# --------------------------------- Main -----------------------------------
if __name__ == "__main__":
    in_chans = 4
    N, H, W = 2, 16, 16

    key = jax.random.PRNGKey(0)
    k1, k2, kp = jax.random.split(key, 3)
    x1 = jax.random.normal(k1, (N, in_chans, H, W), jnp.float32)
    x2 = jax.random.normal(k2, (N, in_chans, H, W), jnp.float32)

    params = make_params(kp, in_chans)

    out = asff_two_pallas(x1, x2, params)
    out = jax.block_until_ready(out)

    ref = asff_two_ref(x1, x2, params)
    assert out.shape == (N, in_chans, H, W)
    assert jnp.allclose(out, ref, atol=1e-5, rtol=1e-5), "Pallas output mismatch vs reference"

    print("KERNEL_OK")
</pallas_src>

<mosaic_0001>
module attributes {stable_mosaic.version = 11 : i64} {
  func.func @asff_two_kernel(%arg0: i32, %arg1: i32, %arg2: memref<1x4x256xf32, #tpu.memory_space<vmem>>, %arg3: memref<1x4x256xf32, #tpu.memory_space<vmem>>, %arg4: memref<8x4xf32, #tpu.memory_space<vmem>>, %arg5: memref<8x1xf32, #tpu.memory_space<vmem>>, %arg6: memref<8x4xf32, #tpu.memory_space<vmem>>, %arg7: memref<8x1xf32, #tpu.memory_space<vmem>>, %arg8: memref<2x8xf32, #tpu.memory_space<vmem>>, %arg9: memref<2x8xf32, #tpu.memory_space<vmem>>, %arg10: memref<2x1xf32, #tpu.memory_space<vmem>>, %arg11: memref<4x4xf32, #tpu.memory_space<vmem>>, %arg12: memref<4x1xf32, #tpu.memory_space<vmem>>, %arg13: memref<1x4x256xf32, #tpu.memory_space<vmem>>) attributes {dimension_semantics = [#tpu.dimension_semantics<parallel>, #tpu.dimension_semantics<parallel>], iteration_bounds = array<i64: 2, 1>, scalar_prefetch = 0 : i64, scratch_operands = 0 : i64, tpu.core_type = #tpu.core_type<tc>, window_params = [{transform_indices = @transform_0, window_bounds = array<i64: 1, 4, 256>}, {transform_indices = @transform_1, window_bounds = array<i64: 1, 4, 256>}, {pipeline_mode = #tpu.pipeline_mode<synchronous>, transform_indices = @transform_2, window_bounds = array<i64: 8, 4>}, {pipeline_mode = #tpu.pipeline_mode<synchronous>, transform_indices = @transform_3, window_bounds = array<i64: 8, 1>}, {pipeline_mode = #tpu.pipeline_mode<synchronous>, transform_indices = @transform_4, window_bounds = array<i64: 8, 4>}, {pipeline_mode = #tpu.pipeline_mode<synchronous>, transform_indices = @transform_5, window_bounds = array<i64: 8, 1>}, {pipeline_mode = #tpu.pipeline_mode<synchronous>, transform_indices = @transform_6, window_bounds = array<i64: 2, 8>}, {pipeline_mode = #tpu.pipeline_mode<synchronous>, transform_indices = @transform_7, window_bounds = array<i64: 2, 8>}, {pipeline_mode = #tpu.pipeline_mode<synchronous>, transform_indices = @transform_8, window_bounds = array<i64: 2, 1>}, {pipeline_mode = #tpu.pipeline_mode<synchronous>, transform_indices = @transform_9, window_bounds = array<i64: 4, 4>}, {pipeline_mode = #tpu.pipeline_mode<synchronous>, transform_indices = @transform_10, window_bounds = array<i64: 4, 1>}, {transform_indices = @transform_11, window_bounds = array<i64: 1, 4, 256>}]} {
    %c0 = arith.constant 0 : index
    %c0_0 = arith.constant 0 : index
    %c0_1 = arith.constant 0 : index
    %0 = vector.load %arg2[%c0, %c0_0, %c0_1] : memref<1x4x256xf32, #tpu.memory_space<vmem>>, vector<1x4x256xf32>
    %1 = vector.shape_cast %0 : vector<1x4x256xf32> to vector<4x256xf32>
    %c0_2 = arith.constant 0 : index
    %c0_3 = arith.constant 0 : index
    %c0_4 = arith.constant 0 : index
    %2 = vector.load %arg3[%c0_2, %c0_3, %c0_4] : memref<1x4x256xf32, #tpu.memory_space<vmem>>, vector<1x4x256xf32>
    %3 = vector.shape_cast %2 : vector<1x4x256xf32> to vector<4x256xf32>
    %c0_5 = arith.constant 0 : index
    %c0_6 = arith.constant 0 : index
    %4 = vector.load %arg4[%c0_5, %c0_6] : memref<8x4xf32, #tpu.memory_space<vmem>>, vector<8x4xf32>
    %cst = arith.constant dense<0.000000e+00> : vector<8x256xf32>
    %5 = tpu.matmul %4, %1, %cst {dimension_numbers = #tpu.dot_dimension_numbers<[1], [0], [0], [1], [0, 0, 1, 1], [], []>} : vector<8x4xf32>, vector<4x256xf32>, vector<8x256xf32> -> vector<8x256xf32>
    %c0_7 = arith.constant 0 : index
    %c0_8 = arith.constant 0 : index
    %6 = vector.load %arg5[%c0_7, %c0_8] : memref<8x1xf32, #tpu.memory_space<vmem>>, vector<8x1xf32>
    %7 = vector.broadcast %6 : vector<8x1xf32> to vector<8x256xf32>
    %8 = arith.addf %5, %7 : vector<8x256xf32>
    %cst_9 = arith.constant 0.000000e+00 : f32
    %9 = vector.broadcast %cst_9 : f32 to vector<8x256xf32>
    %10 = arith.maximumf %8, %9 : vector<8x256xf32>
    %c0_10 = arith.constant 0 : index
    %c0_11 = arith.constant 0 : index
    %11 = vector.load %arg6[%c0_10, %c0_11] : memref<8x4xf32, #tpu.memory_space<vmem>>, vector<8x4xf32>
    %cst_12 = arith.constant dense<0.000000e+00> : vector<8x256xf32>
    %12 = tpu.matmul %11, %3, %cst_12 {dimension_numbers = #tpu.dot_dimension_numbers<[1], [0], [0], [1], [0, 0, 1, 1], [], []>} : vector<8x4xf32>, vector<4x256xf32>, vector<8x256xf32> -> vector<8x256xf32>
    %c0_13 = arith.constant 0 : index
    %c0_14 = arith.constant 0 : index
    %13 = vector.load %arg7[%c0_13, %c0_14] : memref<8x1xf32, #tpu.memory_space<vmem>>, vector<8x1xf32>
    %14 = vector.broadcast %13 : vector<8x1xf32> to vector<8x256xf32>
    %15 = arith.addf %12, %14 : vector<8x256xf32>
    %cst_15 = arith.constant 0.000000e+00 : f32
    %16 = vector.broadcast %cst_15 : f32 to vector<8x256xf32>
    %17 = arith.maximumf %15, %16 : vector<8x256xf32>
    %c0_16 = arith.constant 0 : index
    %c0_17 = arith.constant 0 : index
    %18 = vector.load %arg8[%c0_16, %c0_17] : memref<2x8xf32, #tpu.memory_space<vmem>>, vector<2x8xf32>
    %cst_18 = arith.constant dense<0.000000e+00> : vector<2x256xf32>
    %19 = tpu.matmul %18, %10, %cst_18 {dimension_numbers = #tpu.dot_dimension_numbers<[1], [0], [0], [1], [0, 0, 1, 1], [], []>} : vector<2x8xf32>, vector<8x256xf32>, vector<2x256xf32> -> vector<2x256xf32>
    %c0_19 = arith.constant 0 : index
    %c0_20 = arith.constant 0 : index
    %20 = vector.load %arg9[%c0_19, %c0_20] : memref<2x8xf32, #tpu.memory_space<vmem>>, vector<2x8xf32>
    %cst_21 = arith.constant dense<0.000000e+00> : vector<2x256xf32>
    %21 = tpu.matmul %20, %17, %cst_21 {dimension_numbers = #tpu.dot_dimension_numbers<[1], [0], [0], [1], [0, 0, 1, 1], [], []>} : vector<2x8xf32>, vector<8x256xf32>, vector<2x256xf32> -> vector<2x256xf32>
    %22 = arith.addf %19, %21 : vector<2x256xf32>
    %c0_22 = arith.constant 0 : index
    %c0_23 = arith.constant 0 : index
    %23 = vector.load %arg10[%c0_22, %c0_23] : memref<2x1xf32, #tpu.memory_space<vmem>>, vector<2x1xf32>
    %24 = vector.broadcast %23 : vector<2x1xf32> to vector<2x256xf32>
    %25 = arith.addf %22, %24 : vector<2x256xf32>
    %26 = vector.extract_strided_slice %25 {offsets = [0, 0], sizes = [1, 256], strides = [1, 1]} : vector<2x256xf32> to vector<1x256xf32>
    %27 = vector.extract_strided_slice %25 {offsets = [1, 0], sizes = [1, 256], strides = [1, 1]} : vector<2x256xf32> to vector<1x256xf32>
    %28 = arith.maximumf %26, %27 : vector<1x256xf32>
    %29 = arith.subf %26, %28 : vector<1x256xf32>
    %30 = math.exp %29 : vector<1x256xf32>
    %31 = arith.subf %27, %28 : vector<1x256xf32>
    %32 = math.exp %31 : vector<1x256xf32>
    %33 = arith.addf %30, %32 : vector<1x256xf32>
    %34 = tpu.reciprocal %33 : vector<1x256xf32> -> vector<1x256xf32>
    %35 = arith.mulf %30, %34 : vector<1x256xf32>
    %36 = arith.mulf %32, %34 : vector<1x256xf32>
    %37 = vector.broadcast %35 : vector<1x256xf32> to vector<4x256xf32>
    %38 = arith.mulf %1, %37 : vector<4x256xf32>
    %39 = vector.broadcast %36 : vector<1x256xf32> to vector<4x256xf32>
    %40 = arith.mulf %3, %39 : vector<4x256xf32>
    %41 = arith.addf %38, %40 : vector<4x256xf32>
    %c0_24 = arith.constant 0 : index
    %c0_25 = arith.constant 0 : index
    %42 = vector.load %arg11[%c0_24, %c0_25] : memref<4x4xf32, #tpu.memory_space<vmem>>, vector<4x4xf32>
    %cst_26 = arith.constant dense<0.000000e+00> : vector<4x256xf32>
    %43 = tpu.matmul %42, %41, %cst_26 {dimension_numbers = #tpu.dot_dimension_numbers<[1], [0], [0], [1], [0, 0, 1, 1], [], []>} : vector<4x4xf32>, vector<4x256xf32>, vector<4x256xf32> -> vector<4x256xf32>
    %c0_27 = arith.constant 0 : index
    %c0_28 = arith.constant 0 : index
    %44 = vector.load %arg12[%c0_27, %c0_28] : memref<4x1xf32, #tpu.memory_space<vmem>>, vector<4x1xf32>
    %45 = vector.broadcast %44 : vector<4x1xf32> to vector<4x256xf32>
    %46 = arith.addf %43, %45 : vector<4x256xf32>
    %cst_29 = arith.constant 0.000000e+00 : f32
    %47 = vector.broadcast %cst_29 : f32 to vector<4x256xf32>
    %48 = arith.maximumf %46, %47 : vector<4x256xf32>
    %c0_30 = arith.constant 0 : index
    %c0_31 = arith.constant 0 : index
    %c0_32 = arith.constant 0 : index
    %49 = vector.load %arg13[%c0_30, %c0_31, %c0_32] : memref<1x4x256xf32, #tpu.memory_space<vmem>>, vector<1x4x256xf32>
    %50 = vector.shape_cast %49 : vector<1x4x256xf32> to vector<4x256xf32>
    %51 = vector.shape_cast %48 : vector<4x256xf32> to vector<1x4x256xf32>
    tpu.vector_store %arg13[%c0_30, %c0_31, %c0_32], %51 {strides = array<i32>} : memref<1x4x256xf32, #tpu.memory_space<vmem>>, vector<1x4x256xf32>,
    return
  }
  func.func @transform_0(%arg0: i32, %arg1: i32) -> (i32, i32, i32) {
    %c0_i32 = arith.constant 0 : i32
    %c0_i32_0 = arith.constant 0 : i32
    return %arg0, %c0_i32, %arg1 : i32, i32, i32
  }
  func.func @transform_1(%arg0: i32, %arg1: i32) -> (i32, i32, i32) {
    %c0_i32 = arith.constant 0 : i32
    %c0_i32_0 = arith.constant 0 : i32
    return %arg0, %c0_i32, %arg1 : i32, i32, i32
  }
  func.func @transform_2(%arg0: i32, %arg1: i32) -> (i32, i32) {
    %c0_i32 = arith.constant 0 : i32
    %c0_i32_0 = arith.constant 0 : i32
    %c0_i32_1 = arith.constant 0 : i32
    return %c0_i32, %c0_i32_0 : i32, i32
  }
  func.func @transform_3(%arg0: i32, %arg1: i32) -> (i32, i32) {
    %c0_i32 = arith.constant 0 : i32
    %c0_i32_0 = arith.constant 0 : i32
    %c0_i32_1 = arith.constant 0 : i32
    return %c0_i32, %c0_i32_0 : i32, i32
  }
  func.func @transform_4(%arg0: i32, %arg1: i32) -> (i32, i32) {
    %c0_i32 = arith.constant 0 : i32
    %c0_i32_0 = arith.constant 0 : i32
    %c0_i32_1 = arith.constant 0 : i32
    return %c0_i32, %c0_i32_0 : i32, i32
  }
  func.func @transform_5(%arg0: i32, %arg1: i32) -> (i32, i32) {
    %c0_i32 = arith.constant 0 : i32
    %c0_i32_0 = arith.constant 0 : i32
    %c0_i32_1 = arith.constant 0 : i32
    return %c0_i32, %c0_i32_0 : i32, i32
  }
  func.func @transform_6(%arg0: i32, %arg1: i32) -> (i32, i32) {
    %c0_i32 = arith.constant 0 : i32
    %c0_i32_0 = arith.constant 0 : i32
    %c0_i32_1 = arith.constant 0 : i32
    return %c0_i32, %c0_i32_0 : i32, i32
  }
  func.func @transform_7(%arg0: i32, %arg1: i32) -> (i32, i32) {
    %c0_i32 = arith.constant 0 : i32
    %c0_i32_0 = arith.constant 0 : i32
    %c0_i32_1 = arith.constant 0 : i32
    return %c0_i32, %c0_i32_0 : i32, i32
  }
  func.func @transform_8(%arg0: i32, %arg1: i32) -> (i32, i32) {
    %c0_i32 = arith.constant 0 : i32
    %c0_i32_0 = arith.constant 0 : i32
    %c0_i32_1 = arith.constant 0 : i32
    return %c0_i32, %c0_i32_0 : i32, i32
  }
  func.func @transform_9(%arg0: i32, %arg1: i32) -> (i32, i32) {
    %c0_i32 = arith.constant 0 : i32
    %c0_i32_0 = arith.constant 0 : i32
    %c0_i32_1 = arith.constant 0 : i32
    return %c0_i32, %c0_i32_0 : i32, i32
  }
  func.func @transform_10(%arg0: i32, %arg1: i32) -> (i32, i32) {
    %c0_i32 = arith.constant 0 : i32
    %c0_i32_0 = arith.constant 0 : i32
    %c0_i32_1 = arith.constant 0 : i32
    return %c0_i32, %c0_i32_0 : i32, i32
  }
  func.func @transform_11(%arg0: i32, %arg1: i32) -> (i32, i32, i32) {
    %c0_i32 = arith.constant 0 : i32
    %c0_i32_0 = arith.constant 0 : i32
    return %arg0, %c0_i32, %arg1 : i32, i32, i32
  }
}

</mosaic_0001>

<llo_original>
// kernel: tpu_custom_call.1
$region0: #{tpu_custom_call.1}
  #allocation0 [shape = 'u32[]', space=smem, size = 0x4, offset = 0x4, fixed_abs, tag = 'smem constant byte address 0x4 - core index']
  #allocation1 [shape = 'u32[144,128]{1,0:T(1,128)}', space=vmem, size = 0x12000, scoped, tag = 'internal scratch']
  %s0 = inlined_call_operand.hbm [shape: f32[2,4,256], index: 0, kind: input, shape index: {}]
  %s1 = inlined_call_operand.hbm [shape: f32[2,4,256], index: 1, kind: input, shape index: {}]
  %s2 = inlined_call_operand.hbm [shape: f32[8,4], index: 2, kind: input, shape index: {}]
  %s3 = inlined_call_operand.hbm [shape: f32[8,1], index: 3, kind: input, shape index: {}]
  %s4 = inlined_call_operand.hbm [shape: f32[8,4], index: 4, kind: input, shape index: {}]
  %s5 = inlined_call_operand.hbm [shape: f32[8,1], index: 5, kind: input, shape index: {}]
  %s6 = inlined_call_operand.hbm [shape: f32[2,8], index: 6, kind: input, shape index: {}]
  %s7 = inlined_call_operand.hbm [shape: f32[2,8], index: 7, kind: input, shape index: {}]
  %s8 = inlined_call_operand.hbm [shape: f32[2,1], index: 8, kind: input, shape index: {}]
  %s9 = inlined_call_operand.hbm [shape: f32[4,4], index: 9, kind: input, shape index: {}]
  %s10 = inlined_call_operand.hbm [shape: f32[4,1], index: 10, kind: input, shape index: {}]
  %s11 = inlined_call_operand.hbm [shape: f32[2,4,256], index: 11, kind: output, shape index: {}]
  %s12 = sld [smem:[#allocation0]]
  $region121: #{tpu_custom_call.1} parent=0
    _
  %s14 = ssub.s32 1, %s12
  %s15 = scalar_select 0, %s14, %s12
  $region1: #{tpu_custom_call.1} parent=0
    #allocation2 [shape = 'u8[8192]{0}', space=vmem, size = 0x2000, scoped, tag = 'input window, operand 0']
    #allocation3 [shape = 's32[2]{0}', space=sflag, size = 0x8, scoped, tag = 'scoped memory for tpu_custom_call.1']
    #allocation4 [shape = 's32[2]{0}', space=sflag, size = 0x8, scoped, tag = 'scoped memory for tpu_custom_call.1']
    #allocation5 [shape = 'u8[8192]{0}', space=vmem, size = 0x2000, scoped, tag = 'input window, operand 1']
    #allocation6 [shape = 's32[2]{0}', space=sflag, size = 0x8, scoped, tag = 'scoped memory for tpu_custom_call.1']
    #allocation7 [shape = 'u8[4096]{0}', space=vmem, size = 0x1000, scoped, tag = 'input window, operand 2, single buffered']
    #allocation8 [shape = 'u8[4096]{0}', space=vmem, size = 0x1000, scoped, tag = 'input window, operand 3, single buffered']
    #allocation9 [shape = 's32[1]{0}', space=sflag, size = 0x4, scoped, tag = 'scoped memory for tpu_custom_call.1']
    #allocation10 [shape = 'u8[4096]{0}', space=vmem, size = 0x1000, scoped, tag = 'input window, operand 4, single buffered']
    #allocation11 [shape = 'u8[4096]{0}', space=vmem, size = 0x1000, scoped, tag = 'input window, operand 5, single buffered']
    #allocation12 [shape = 's32[1]{0}', space=sflag, size = 0x4, scoped, tag = 'scoped memory for tpu_custom_call.1']
    #allocation13 [shape = 'u8[1024]{0}', space=vmem, size = 0x400, scoped, tag = 'input window, operand 6, single buffered']
    #allocation14 [shape = 'u8[1024]{0}', space=vmem, size = 0x400, scoped, tag = 'input window, operand 7, single buffered']
    #allocation15 [shape = 's32[1]{0}', space=sflag, size = 0x4, scoped, tag = 'scoped memory for tpu_custom_call.1']
    #allocation16 [shape = 'u8[1024]{0}', space=vmem, size = 0x400, scoped, tag = 'input window, operand 8, single buffered']
    #allocation17 [shape = 'u8[2048]{0}', space=vmem, size = 0x800, scoped, tag = 'input window, operand 9, single buffered']
    #allocation18 [shape = 's32[1]{0}', space=sflag, size = 0x4, scoped, tag = 'scoped memory for tpu_custom_call.1']
    #allocation19 [shape = 'u8[2048]{0}', space=vmem, size = 0x800, scoped, tag = 'input window, operand 10, single buffered']
    #allocation20 [shape = 'u8[8192]{0}', space=vmem, size = 0x2000, scoped, tag = 'output window, operand 0']
    %16 = vsyncpa [#allocation3], 0
    %s17 = scalar_lea.sflag [#allocation3], 1
    %18 = vsyncpa %s17, 0
    %19 = vsyncpa [#allocation6], 0
    %s20 = scalar_lea.sflag [#allocation6], 1
    %21 = vsyncpa %s20, 0
    %22 = vsyncpa [#allocation9], 0
    %23 = vsyncpa [#allocation12], 0
    %24 = vsyncpa [#allocation15], 0
    %25 = vsyncpa [#allocation18], 0
    %26 = vsyncpa [#allocation4], 0
    %s27 = scalar_lea.sflag [#allocation4], 1
    %28 = vsyncpa %s27, 0
    loop: start=0, step=1, limit=4
    $region2: #{tpu_custom_call.1} parent=1 // loop_pre_header
      _
    $region3: #{tpu_custom_call.1} parent=1 // loop_header
      %s30 = sphi 0, %s34
      %p31 = scmp.ge.s32.totalorder %s30, 4
      %s37 = sphi 0, %s49
      %s38 = sphi 0, %s45
      %s39 = sphi 0, %s37
      %s40 = sphi 0, %s38
      %s41 = sphi 0, %s39
      %s42 = sphi 0, %s40
      %s54 = sphi 0, %s56
      %s57 = sphi 0, %s54
      %s58 = sphi 0, %s57
      %s74 = sphi 0, %s58
      %s82 = sphi 0, %s84
      %s85 = sphi 0, %s82
      %s86 = sphi 0, %s85
      %s102 = sphi 0, %s86
      %s106 = sphi 0, %s106
      %s108 = sphi 0, %s106
      %s109 = sphi 0, %s108
      %s123 = sphi 0, %s109
      %s127 = sphi 0, %s127
      %s129 = sphi 0, %s127
      %s130 = sphi 0, %s129
      %s144 = sphi 0, %s130
      %s148 = sphi 0, %s148
      %s150 = sphi 0, %s148
      %s151 = sphi 0, %s150
      %s165 = sphi 0, %s151
      %s169 = sphi 0, %s169
      %s171 = sphi 0, %s169
      %s172 = sphi 0, %s171
      %s186 = sphi 0, %s172
      %s190 = sphi 0, %s190
      %s192 = sphi 0, %s190
      %s193 = sphi 0, %s192
      %s207 = sphi 0, %s193
      %s211 = sphi 0, %s211
      %s213 = sphi 0, %s211
      %s214 = sphi 0, %s213
      %s228 = sphi 0, %s214
      %s232 = sphi 0, %s232
      %s234 = sphi 0, %s232
      %s235 = sphi 0, %s234
      %s249 = sphi 0, %s235
      %s253 = sphi 0, %s253
      %s255 = sphi 0, %s253
      %s256 = sphi 0, %s255
      %s270 = sphi 0, %s256
      %s274 = sphi 0, %s274
      %s276 = sphi 0, %s274
      %s277 = sphi 0, %s276
      %s291 = sphi 0, %s277
      %s299 = sphi 0, %s301
      %s302 = sphi 0, %s299
      %s303 = sphi 0, %s302
      %s319 = sphi 0, %s303
    $region4: #{tpu_custom_call.1} parent=1 // loop_header_branch
      %33 = sbr.rel (%p31) target = $region8
    $region5: #{tpu_custom_call.1} parent=1 // loop_body
      %s35 = ssub.s32 %s30, 1
      %s36 = ssub.s32 %s30, 2
      %s43 = sadd.s32 1, %s38
      %p44 = scmp.ge.s32.totalorder %s43, 1
      %s45 = scalar_select %p44, 0, %s43
      %s46 = sadd.s32 1, %s37
      %s47 = scalar_select %p44, %s46, %s37
      %p48 = scmp.ge.s32.totalorder %s47, 2
      %s49 = scalar_select %p48, 0, %s47
      %s50 = ssub.s32 %s37, %s49
      %s51 = ssub.s32 %s38, %s45
      %s52 = sor.u32 %s50, %s51
      %p53 = scmp.eq.s32.totalorder %s52, 0
      %s55 = sadd.s32 %s54, 1
      %s56 = scalar_select %p53, %s54, %s55
      %p59 = pneg %p53
      %p60 = scmp.eq.s32.totalorder %s30, 1
      %p61 = por %p59, %p60
      %p62 = scmp.ne.s32.totalorder %s54, %s57
      %p63 = scmp.eq.s32.totalorder %s30, 0
      %p64 = por %p62, %p63
      %p65 = scmp.ne.s32.totalorder %s54, %s57
      %p66 = scmp.eq.s32.totalorder %s35, 1
      %p67 = por %p65, %p66
      %p68 = scmp.ne.s32.totalorder %s57, %s58
      %p69 = scmp.eq.s32.totalorder %s35, 0
      %p70 = por %p68, %p69
      %p71 = scmp.ne.s32.totalorder %s57, %s58
      %p72 = scmp.eq.s32.totalorder %s36, 1
      %p73 = por %p71, %p72
      %p75 = scmp.ne.s32.totalorder %s58, %s74
      %p76 = scmp.eq.s32.totalorder %s36, 0
      %p77 = por %p75, %p76
      %s78 = ssub.s32 %s37, %s49
      %s79 = ssub.s32 %s38, %s45
      %s80 = sor.u32 %s78, %s79
      %p81 = scmp.eq.s32.totalorder %s80, 0
      %s83 = sadd.s32 %s82, 1
      %s84 = scalar_select %p81, %s82, %s83
      %p87 = pneg %p81
      %p88 = scmp.eq.s32.totalorder %s30, 1
      %p89 = por %p87, %p88
      %p90 = scmp.ne.s32.totalorder %s82, %s85
      %p91 = scmp.eq.s32.totalorder %s30, 0
      %p92 = por %p90, %p91
      %p93 = scmp.ne.s32.totalorder %s82, %s85
      %p94 = scmp.eq.s32.totalorder %s35, 1
      %p95 = por %p93, %p94
      %p96 = scmp.ne.s32.totalorder %s85, %s86
      %p97 = scmp.eq.s32.totalorder %s35, 0
      %p98 = por %p96, %p97
      %p99 = scmp.ne.s32.totalorder %s85, %s86
      %p100 = scmp.eq.s32.totalorder %s36, 1
      %p101 = por %p99, %p100
      %p103 = scmp.ne.s32.totalorder %s86, %s102
      %p104 = scmp.eq.s32.totalorder %s36, 0
      %p105 = por %p103, %p104
      %s107 = sadd.s32 %s106, 1
      %p110 = scmp.eq.s32.totalorder %s30, 1
      %p111 = scmp.ne.s32.totalorder %s106, %s108
      %p112 = scmp.eq.s32.totalorder %s30, 0
      %p113 = por %p111, %p112
      %p114 = scmp.ne.s32.totalorder %s106, %s108
      %p115 = scmp.eq.s32.totalorder %s35, 1
      %p116 = por %p114, %p115
      %p117 = scmp.ne.s32.totalorder %s108, %s109
      %p118 = scmp.eq.s32.totalorder %s35, 0
      %p119 = por %p117, %p118
      %p120 = scmp.ne.s32.totalorder %s108, %s109
      %p121 = scmp.eq.s32.totalorder %s36, 1
      %p122 = por %p120, %p121
      %p124 = scmp.ne.s32.totalorder %s109, %s123
      %p125 = scmp.eq.s32.totalorder %s36, 0
      %p126 = por %p124, %p125
      %s128 = sadd.s32 %s127, 1
      %p131 = scmp.eq.s32.totalorder %s30, 1
      %p132 = scmp.ne.s32.totalorder %s127, %s129
      %p133 = scmp.eq.s32.totalorder %s30, 0
      %p134 = por %p132, %p133
      %p135 = scmp.ne.s32.totalorder %s127, %s129
      %p136 = scmp.eq.s32.totalorder %s35, 1
      %p137 = por %p135, %p136
      %p138 = scmp.ne.s32.totalorder %s129, %s130
      %p139 = scmp.eq.s32.totalorder %s35, 0
      %p140 = por %p138, %p139
      %p141 = scmp.ne.s32.totalorder %s129, %s130
      %p142 = scmp.eq.s32.totalorder %s36, 1
      %p143 = por %p141, %p142
      %p145 = scmp.ne.s32.totalorder %s130, %s144
      %p146 = scmp.eq.s32.totalorder %s36, 0
      %p147 = por %p145, %p146
      %s149 = sadd.s32 %s148, 1
      %p152 = scmp.eq.s32.totalorder %s30, 1
      %p153 = scmp.ne.s32.totalorder %s148, %s150
      %p154 = scmp.eq.s32.totalorder %s30, 0
      %p155 = por %p153, %p154
      %p156 = scmp.ne.s32.totalorder %s148, %s150
      %p157 = scmp.eq.s32.totalorder %s35, 1
      %p158 = por %p156, %p157
      %p159 = scmp.ne.s32.totalorder %s150, %s151
      %p160 = scmp.eq.s32.totalorder %s35, 0
      %p161 = por %p159, %p160
      %p162 = scmp.ne.s32.totalorder %s150, %s151
      %p163 = scmp.eq.s32.totalorder %s36, 1
      %p164 = por %p162, %p163
      %p166 = scmp.ne.s32.totalorder %s151, %s165
      %p167 = scmp.eq.s32.totalorder %s36, 0
      %p168 = por %p166, %p167
      %s170 = sadd.s32 %s169, 1
      %p173 = scmp.eq.s32.totalorder %s30, 1
      %p174 = scmp.ne.s32.totalorder %s169, %s171
      %p175 = scmp.eq.s32.totalorder %s30, 0
      %p176 = por %p174, %p175
      %p177 = scmp.ne.s32.totalorder %s169, %s171
      %p178 = scmp.eq.s32.totalorder %s35, 1
      %p179 = por %p177, %p178
      %p180 = scmp.ne.s32.totalorder %s171, %s172
      %p181 = scmp.eq.s32.totalorder %s35, 0
      %p182 = por %p180, %p181
      %p183 = scmp.ne.s32.totalorder %s171, %s172
      %p184 = scmp.eq.s32.totalorder %s36, 1
      %p185 = por %p183, %p184
      %p187 = scmp.ne.s32.totalorder %s172, %s186
      %p188 = scmp.eq.s32.totalorder %s36, 0
      %p189 = por %p187, %p188
      %s191 = sadd.s32 %s190, 1
      %p194 = scmp.eq.s32.totalorder %s30, 1
      %p195 = scmp.ne.s32.totalorder %s190, %s192
      %p196 = scmp.eq.s32.totalorder %s30, 0
      %p197 = por %p195, %p196
      %p198 = scmp.ne.s32.totalorder %s190, %s192
      %p199 = scmp.eq.s32.totalorder %s35, 1
      %p200 = por %p198, %p199
      %p201 = scmp.ne.s32.totalorder %s192, %s193
      %p202 = scmp.eq.s32.totalorder %s35, 0
      %p203 = por %p201, %p202
      %p204 = scmp.ne.s32.totalorder %s192, %s193
      %p205 = scmp.eq.s32.totalorder %s36, 1
      %p206 = por %p204, %p205
      %p208 = scmp.ne.s32.totalorder %s193, %s207
      %p209 = scmp.eq.s32.totalorder %s36, 0
      %p210 = por %p208, %p209
      %s212 = sadd.s32 %s211, 1
      %p215 = scmp.eq.s32.totalorder %s30, 1
      %p216 = scmp.ne.s32.totalorder %s211, %s213
      %p217 = scmp.eq.s32.totalorder %s30, 0
      %p218 = por %p216, %p217
      %p219 = scmp.ne.s32.totalorder %s211, %s213
      %p220 = scmp.eq.s32.totalorder %s35, 1
      %p221 = por %p219, %p220
      %p222 = scmp.ne.s32.totalorder %s213, %s214
      %p223 = scmp.eq.s32.totalorder %s35, 0
      %p224 = por %p222, %p223
      %p225 = scmp.ne.s32.totalorder %s213, %s214
      %p226 = scmp.eq.s32.totalorder %s36, 1
      %p227 = por %p225, %p226
      %p229 = scmp.ne.s32.totalorder %s214, %s228
      %p230 = scmp.eq.s32.totalorder %s36, 0
      %p231 = por %p229, %p230
      %s233 = sadd.s32 %s232, 1
      %p236 = scmp.eq.s32.totalorder %s30, 1
      %p237 = scmp.ne.s32.totalorder %s232, %s234
      %p238 = scmp.eq.s32.totalorder %s30, 0
      %p239 = por %p237, %p238
      %p240 = scmp.ne.s32.totalorder %s232, %s234
      %p241 = scmp.eq.s32.totalorder %s35, 1
      %p242 = por %p240, %p241
      %p243 = scmp.ne.s32.totalorder %s234, %s235
      %p244 = scmp.eq.s32.totalorder %s35, 0
      %p245 = por %p243, %p244
      %p246 = scmp.ne.s32.totalorder %s234, %s235
      %p247 = scmp.eq.s32.totalorder %s36, 1
      %p248 = por %p246, %p247
      %p250 = scmp.ne.s32.totalorder %s235, %s249
      %p251 = scmp.eq.s32.totalorder %s36, 0
      %p252 = por %p250, %p251
      %s254 = sadd.s32 %s253, 1
      %p257 = scmp.eq.s32.totalorder %s30, 1
      %p258 = scmp.ne.s32.totalorder %s253, %s255
      %p259 = scmp.eq.s32.totalorder %s30, 0
      %p260 = por %p258, %p259
      %p261 = scmp.ne.s32.totalorder %s253, %s255
      %p262 = scmp.eq.s32.totalorder %s35, 1
      %p263 = por %p261, %p262
      %p264 = scmp.ne.s32.totalorder %s255, %s256
      %p265 = scmp.eq.s32.totalorder %s35, 0
      %p266 = por %p264, %p265
      %p267 = scmp.ne.s32.totalorder %s255, %s256
      %p268 = scmp.eq.s32.totalorder %s36, 1
      %p269 = por %p267, %p268
      %p271 = scmp.ne.s32.totalorder %s256, %s270
      %p272 = scmp.eq.s32.totalorder %s36, 0
      %p273 = por %p271, %p272
      %s275 = sadd.s32 %s274, 1
      %p278 = scmp.eq.s32.totalorder %s30, 1
      %p279 = scmp.ne.s32.totalorder %s274, %s276
      %p280 = scmp.eq.s32.totalorder %s30, 0
      %p281 = por %p279, %p280
      %p282 = scmp.ne.s32.totalorder %s274, %s276
      %p283 = scmp.eq.s32.totalorder %s35, 1
      %p284 = por %p282, %p283
      %p285 = scmp.ne.s32.totalorder %s276, %s277
      %p286 = scmp.eq.s32.totalorder %s35, 0
      %p287 = por %p285, %p286
      %p288 = scmp.ne.s32.totalorder %s276, %s277
      %p289 = scmp.eq.s32.totalorder %s36, 1
      %p290 = por %p288, %p289
      %p292 = scmp.ne.s32.totalorder %s277, %s291
      %p293 = scmp.eq.s32.totalorder %s36, 0
      %p294 = por %p292, %p293
      %s295 = ssub.s32 %s37, %s49
      %s296 = ssub.s32 %s38, %s45
      %s297 = sor.u32 %s295, %s296
      %p298 = scmp.eq.s32.totalorder %s297, 0
      %s300 = sadd.s32 %s299, 1
      %s301 = scalar_select %p298, %s299, %s300
      %p304 = pneg %p298
      %p305 = scmp.eq.s32.totalorder %s30, 1
      %p306 = por %p304, %p305
      %p307 = scmp.ne.s32.totalorder %s299, %s302
      %p308 = scmp.eq.s32.totalorder %s30, 0
      %p309 = por %p307, %p308
      %p310 = scmp.ne.s32.totalorder %s299, %s302
      %p311 = scmp.eq.s32.totalorder %s35, 1
      %p312 = por %p310, %p311
      %p313 = scmp.ne.s32.totalorder %s302, %s303
      %p314 = scmp.eq.s32.totalorder %s35, 0
      %p315 = por %p313, %p314
      %p316 = scmp.ne.s32.totalorder %s302, %s303
      %p317 = scmp.eq.s32.totalorder %s36, 1
      %p318 = por %p316, %p317
      %p320 = scmp.ne.s32.totalorder %s303, %s319
      %p321 = scmp.eq.s32.totalorder %s36, 0
      %p322 = por %p320, %p321
      %p323 = scmp.le.s32.totalorder 1, %s30
      %p324 = scmp.lt.s32.totalorder %s30, 3
      %p325 = pnand %p323, %p324
      %p326 = pneg %p325
      // Predicated region
      $region9: #{tpu_custom_call.1} parent=5 // pred_check
        _
      $region10: #{tpu_custom_call.1} parent=5 // pred_check_branch
        %328 = sbr.rel (%p325) target = $region12
      $region11: #{tpu_custom_call.1} parent=5 // pred_region
        %s329 = ssub.s32 %s30, 1
        // Predicated region
        $region13: #{tpu_custom_call.1} parent=11 // pred_check
          %p330 = pneg %p119
        $region14: #{tpu_custom_call.1} parent=11 // pred_check_branch
          %332 = sbr.rel (%p330) target = $region16
        $region15: #{tpu_custom_call.1} parent=11 // pred_region
          %s334 = ssub.s32 128, 128
          %335 = vsyncadd [#allocation6], %s334
          %s337 = sshll.u32 [#allocation7], 4
          %s338 = int_to_ptr.vmem [resolvable:$true] %s337
          %340 = dma.hbm_to_vmem [thread:$0]  %s2, 128, %s338, [#allocation6]
        $region16: #{tpu_custom_call.1} parent=11 // pred_fallthru
          _
        // Predicated region
        $region17: #{tpu_custom_call.1} parent=11 // pred_check
          %p341 = pneg %p140
        $region18: #{tpu_custom_call.1} parent=11 // pred_check_branch
          %343 = sbr.rel (%p341) target = $region20
        $region19: #{tpu_custom_call.1} parent=11 // pred_region
          %s345 = ssub.s32 128, 128
          %346 = vsyncadd [#allocation9], %s345
          %s348 = sshll.u32 [#allocation8], 4
          %s349 = int_to_ptr.vmem [resolvable:$true] %s348
          %351 = dma.hbm_to_vmem [thread:$0]  %s3, 128, %s349, [#allocation9]
        $region20: #{tpu_custom_call.1} parent=11 // pred_fallthru
          _
        // Predicated region
        $region21: #{tpu_custom_call.1} parent=11 // pred_check
          %p352 = pneg %p161
        $region22: #{tpu_custom_call.1} parent=11 // pred_check_branch
          %354 = sbr.rel (%p352) target = $region24
        $region23: #{tpu_custom_call.1} parent=11 // pred_region
          %s356 = ssub.s32 128, 128
          %357 = vsyncadd [#allocation9], %s356
          %s359 = sshll.u32 [#allocation10], 4
          %s360 = int_to_ptr.vmem [resolvable:$true] %s359
          %362 = dma.hbm_to_vmem [thread:$0]  %s4, 128, %s360, [#allocation9]
        $region24: #{tpu_custom_call.1} parent=11 // pred_fallthru
          _
        // Predicated region
        $region25: #{tpu_custom_call.1} parent=11 // pred_check
          %p363 = pneg %p182
        $region26: #{tpu_custom_call.1} parent=11 // pred_check_branch
          %365 = sbr.rel (%p363) target = $region28
        $region27: #{tpu_custom_call.1} parent=11 // pred_region
          %s367 = ssub.s32 128, 128
          %368 = vsyncadd [#allocation12], %s367
          %s370 = sshll.u32 [#allocation11], 4
          %s371 = int_to_ptr.vmem [resolvable:$true] %s370
          %373 = dma.hbm_to_vmem [thread:$0]  %s5, 128, %s371, [#allocation12]
        $region28: #{tpu_custom_call.1} parent=11 // pred_fallthru
          _
        // Predicated region
        $region29: #{tpu_custom_call.1} parent=11 // pred_check
          %p374 = pneg %p203
        $region30: #{tpu_custom_call.1} parent=11 // pred_check_branch
          %376 = sbr.rel (%p374) target = $region32
        $region31: #{tpu_custom_call.1} parent=11 // pred_region
          %s378 = ssub.s32 32, 32
          %379 = vsyncadd [#allocation12], %s378
          %s381 = sshll.u32 [#allocation13], 4
          %s382 = int_to_ptr.vmem [resolvable:$true] %s381
          %384 = dma.hbm_to_vmem [thread:$0]  %s6, 32, %s382, [#allocation12]
        $region32: #{tpu_custom_call.1} parent=11 // pred_fallthru
          _
        // Predicated region
        $region33: #{tpu_custom_call.1} parent=11 // pred_check
          %p385 = pneg %p224
        $region34: #{tpu_custom_call.1} parent=11 // pred_check_branch
          %387 = sbr.rel (%p385) target = $region36
        $region35: #{tpu_custom_call.1} parent=11 // pred_region
          %s389 = ssub.s32 32, 32
          %390 = vsyncadd [#allocation15], %s389
          %s392 = sshll.u32 [#allocation14], 4
          %s393 = int_to_ptr.vmem [resolvable:$true] %s392
          %395 = dma.hbm_to_vmem [thread:$0]  %s7, 32, %s393, [#allocation15]
        $region36: #{tpu_custom_call.1} parent=11 // pred_fallthru
          _
        // Predicated region
        $region37: #{tpu_custom_call.1} parent=11 // pred_check
          %p396 = pneg %p245
        $region38: #{tpu_custom_call.1} parent=11 // pred_check_branch
          %398 = sbr.rel (%p396) target = $region40
        $region39: #{tpu_custom_call.1} parent=11 // pred_region
          %s400 = ssub.s32 32, 32
          %401 = vsyncadd [#allocation15], %s400
          %s403 = sshll.u32 [#allocation16], 4
          %s404 = int_to_ptr.vmem [resolvable:$true] %s403
          %406 = dma.hbm_to_vmem [thread:$0]  %s8, 32, %s404, [#allocation15]
        $region40: #{tpu_custom_call.1} parent=11 // pred_fallthru
          _
        // Predicated region
        $region41: #{tpu_custom_call.1} parent=11 // pred_check
          %p407 = pneg %p266
        $region42: #{tpu_custom_call.1} parent=11 // pred_check_branch
          %409 = sbr.rel (%p407) target = $region44
        $region43: #{tpu_custom_call.1} parent=11 // pred_region
          %s411 = ssub.s32 64, 64
          %412 = vsyncadd [#allocation18], %s411
          %s414 = sshll.u32 [#allocation17], 4
          %s415 = int_to_ptr.vmem [resolvable:$true] %s414
          %417 = dma.hbm_to_vmem [thread:$0]  %s9, 64, %s415, [#allocation18]
        $region44: #{tpu_custom_call.1} parent=11 // pred_fallthru
          _
        // Predicated region
        $region45: #{tpu_custom_call.1} parent=11 // pred_check
          %p418 = pneg %p287
        $region46: #{tpu_custom_call.1} parent=11 // pred_check_branch
          %420 = sbr.rel (%p418) target = $region48
        $region47: #{tpu_custom_call.1} parent=11 // pred_region
          %s422 = ssub.s32 64, 64
          %423 = vsyncadd [#allocation18], %s422
          %s425 = sshll.u32 [#allocation19], 4
          %s426 = int_to_ptr.vmem [resolvable:$true] %s425
          %428 = dma.hbm_to_vmem [thread:$0]  %s10, 64, %s426, [#allocation18]
        $region48: #{tpu_custom_call.1} parent=11 // pred_fallthru
          _
      $region12: #{tpu_custom_call.1} parent=5 // pred_fallthru
        _
      %p429 = scmp.lt.s32.totalorder %s30, 2
      // Predicated region
      $region49: #{tpu_custom_call.1} parent=5 // pred_check
        %p430 = pneg %p429
      $region50: #{tpu_custom_call.1} parent=5 // pred_check_branch
        %432 = sbr.rel (%p430) target = $region52
      $region51: #{tpu_custom_call.1} parent=5 // pred_region
        // Predicated region
        $region53: #{tpu_custom_call.1} parent=51 // pred_check
          %p433 = pneg %p64
        $region54: #{tpu_custom_call.1} parent=51 // pred_check_branch
          %435 = sbr.rel (%p433) target = $region56
        $region55: #{tpu_custom_call.1} parent=51 // pred_region
          %s436 = sand.u32 %s54, 1
          %s437 = scalar_lea.sflag [#allocation3], %s436
          %s438 = sand.u32 %s54, 1
          %s439 = smul.addr %s438, 8
          %s440 = scalar_lea.vmem [#allocation2], %s439
          %s441 = smul.u32 2, %s38
          %s443 = ssub.s32 128, 128
          %444 = vsyncadd %s437, %s443
          %s445 = smul.addr %s37, 2
          %s446 = sadd.s32 %s441, %s445
          %s447 = smul.addr %s446, 64
          %s448 = scalar_lea.hbm %s0, %s447
          %s450 = sshll.u32 %s440, 4
          %s451 = int_to_ptr.vmem [resolvable:$true] %s450
          %453 = dma.hbm_to_vmem [thread:$0]  %s448, 128, %s451, %s437
        $region56: #{tpu_custom_call.1} parent=51 // pred_fallthru
          _
        // Predicated region
        $region57: #{tpu_custom_call.1} parent=51 // pred_check
          %p454 = pneg %p92
        $region58: #{tpu_custom_call.1} parent=51 // pred_check_branch
          %456 = sbr.rel (%p454) target = $region60
        $region59: #{tpu_custom_call.1} parent=51 // pred_region
          %s457 = sand.u32 %s30, 1
          %s458 = scalar_lea.sflag [#allocation6], %s457
          %s459 = sand.u32 %s82, 1
          %s460 = smul.addr %s459, 8
          %s461 = scalar_lea.vmem [#allocation5], %s460
          %s462 = smul.u32 2, %s38
          %s464 = ssub.s32 128, 128
          %465 = vsyncadd %s458, %s464
          %s466 = smul.addr %s37, 2
          %s467 = sadd.s32 %s462, %s466
          %s468 = smul.addr %s467, 64
          %s469 = scalar_lea.hbm %s1, %s468
          %s471 = sshll.u32 %s461, 4
          %s472 = int_to_ptr.vmem [resolvable:$true] %s471
          %474 = dma.hbm_to_vmem [thread:$0]  %s469, 128, %s472, %s458
        $region60: #{tpu_custom_call.1} parent=51 // pred_fallthru
          _
      $region52: #{tpu_custom_call.1} parent=5 // pred_fallthru
        _
      %p475 = scmp.le.s32.totalorder 1, %s30
      %p476 = scmp.lt.s32.totalorder %s30, 3
      %p477 = pnand %p475, %p476
      %p478 = pneg %p477
      // Predicated region
      $region61: #{tpu_custom_call.1} parent=5 // pred_check
        _
      $region62: #{tpu_custom_call.1} parent=5 // pred_check_branch
        %480 = sbr.rel (%p477) target = $region64
      $region63: #{tpu_custom_call.1} parent=5 // pred_region
        %s481 = ssub.s32 %s30, 1
        %s482 = sand.u32 %s57, 1
        %s483 = scalar_lea.sflag [#allocation3], %s482
        %s484 = sand.u32 %s57, 1
        %s485 = smul.addr %s484, 8
        %s486 = scalar_lea.vmem [#allocation2], %s485
        // Predicated region
        $region65: #{tpu_custom_call.1} parent=63 // pred_check
          %p487 = pneg %p70
        $region66: #{tpu_custom_call.1} parent=63 // pred_check_branch
          %489 = sbr.rel (%p487) target = $region68
        $region67: #{tpu_custom_call.1} parent=63 // pred_region
          %490 = dma.done %s483, 128
        $region68: #{tpu_custom_call.1} parent=63 // pred_fallthru
          _
        %s491 = sand.u32 %s35, 1
        %s492 = scalar_lea.sflag [#allocation6], %s491
        %s493 = sand.u32 %s85, 1
        %s494 = smul.addr %s493, 8
        %s495 = scalar_lea.vmem [#allocation5], %s494
        // Predicated region
        $region69: #{tpu_custom_call.1} parent=63 // pred_check
          %p496 = pneg %p98
        $region70: #{tpu_custom_call.1} parent=63 // pred_check_branch
          %498 = sbr.rel (%p496) target = $region72
        $region71: #{tpu_custom_call.1} parent=63 // pred_region
          %499 = dma.done %s492, 128
        $region72: #{tpu_custom_call.1} parent=63 // pred_fallthru
          _
        // Predicated region
        $region73: #{tpu_custom_call.1} parent=63 // pred_check
          %p500 = pneg %p119
        $region74: #{tpu_custom_call.1} parent=63 // pred_check_branch
          %502 = sbr.rel (%p500) target = $region76
        $region75: #{tpu_custom_call.1} parent=63 // pred_region
          %503 = dma.done [#allocation6], 128
        $region76: #{tpu_custom_call.1} parent=63 // pred_fallthru
          _
        // Predicated region
        $region77: #{tpu_custom_call.1} parent=63 // pred_check
          %p504 = pneg %p140
        $region78: #{tpu_custom_call.1} parent=63 // pred_check_branch
          %506 = sbr.rel (%p504) target = $region80
        $region79: #{tpu_custom_call.1} parent=63 // pred_region
          %507 = dma.done [#allocation9], 128
        $region80: #{tpu_custom_call.1} parent=63 // pred_fallthru
          _
        // Predicated region
        $region81: #{tpu_custom_call.1} parent=63 // pred_check
          %p508 = pneg %p161
        $region82: #{tpu_custom_call.1} parent=63 // pred_check_branch
          %510 = sbr.rel (%p508) target = $region84
        $region83: #{tpu_custom_call.1} parent=63 // pred_region
          %511 = dma.done [#allocation9], 128
        $region84: #{tpu_custom_call.1} parent=63 // pred_fallthru
          _
        // Predicated region
        $region85: #{tpu_custom_call.1} parent=63 // pred_check
          %p512 = pneg %p182
        $region86: #{tpu_custom_call.1} parent=63 // pred_check_branch
          %514 = sbr.rel (%p512) target = $region88
        $region87: #{tpu_custom_call.1} parent=63 // pred_region
          %515 = dma.done [#allocation12], 128
        $region88: #{tpu_custom_call.1} parent=63 // pred_fallthru
          _
        // Predicated region
        $region89: #{tpu_custom_call.1} parent=63 // pred_check
          %p516 = pneg %p203
        $region90: #{tpu_custom_call.1} parent=63 // pred_check_branch
          %518 = sbr.rel (%p516) target = $region92
        $region91: #{tpu_custom_call.1} parent=63 // pred_region
          %519 = dma.done [#allocation12], 32
        $region92: #{tpu_custom_call.1} parent=63 // pred_fallthru
          _
        // Predicated region
        $region93: #{tpu_custom_call.1} parent=63 // pred_check
          %p520 = pneg %p224
        $region94: #{tpu_custom_call.1} parent=63 // pred_check_branch
          %522 = sbr.rel (%p520) target = $region96
        $region95: #{tpu_custom_call.1} parent=63 // pred_region
          %523 = dma.done [#allocation15], 32
        $region96: #{tpu_custom_call.1} parent=63 // pred_fallthru
          _
        // Predicated region
        $region97: #{tpu_custom_call.1} parent=63 // pred_check
          %p524 = pneg %p245
        $region98: #{tpu_custom_call.1} parent=63 // pred_check_branch
          %526 = sbr.rel (%p524) target = $region100
        $region99: #{tpu_custom_call.1} parent=63 // pred_region
          %527 = dma.done [#allocation15], 32
        $region100: #{tpu_custom_call.1} parent=63 // pred_fallthru
          _
        // Predicated region
        $region101: #{tpu_custom_call.1} parent=63 // pred_check
          %p528 = pneg %p266
        $region102: #{tpu_custom_call.1} parent=63 // pred_check_branch
          %530 = sbr.rel (%p528) target = $region104
        $region103: #{tpu_custom_call.1} parent=63 // pred_region
          %531 = dma.done [#allocation18], 64
        $region104: #{tpu_custom_call.1} parent=63 // pred_fallthru
          _
        // Predicated region
        $region105: #{tpu_custom_call.1} parent=63 // pred_check
          %p532 = pneg %p287
        $region106: #{tpu_custom_call.1} parent=63 // pred_check_branch
          %534 = sbr.rel (%p532) target = $region108
        $region107: #{tpu_custom_call.1} parent=63 // pred_region
          %535 = dma.done [#allocation18], 64
        $region108: #{tpu_custom_call.1} parent=63 // pred_fallthru
          _
        %s536 = sand.u32 %s57, 1
        %s537 = scalar_lea.sflag [#allocation3], %s536
        %s538 = sand.u32 %s57, 1
        %s539 = smul.addr %s538, 8
        %s540 = scalar_lea.vmem [#allocation2], %s539
        %p541 = pneg %p70
        %p542 = pneg %p67
        %s543 = sand.u32 %s35, 1
        %s544 = scalar_lea.sflag [#allocation6], %s543
        %s545 = sand.u32 %s85, 1
        %s546 = smul.addr %s545, 8
        %s547 = scalar_lea.vmem [#allocation5], %s546
        %p548 = pneg %p98
        %p549 = pneg %p95
        %p550 = pneg %p119
        %p551 = pneg %p116
        %p552 = pneg %p140
        %p553 = pneg %p137
        %p554 = pneg %p161
        %p555 = pneg %p158
        %p556 = pneg %p182
        %p557 = pneg %p179
        %p558 = pneg %p203
        %p559 = pneg %p200
        %p560 = pneg %p224
        %p561 = pneg %p221
        %p562 = pneg %p245
        %p563 = pneg %p242
        %p564 = pneg %p266
        %p565 = pneg %p263
        %p566 = pneg %p287
        %p567 = pneg %p284
        %p568 = pneg %p315
        %p569 = pneg %p312
        %s570 = sand.u32 %s302, 1
        %s571 = scalar_lea.sflag [#allocation4], %s570
        %s572 = sand.u32 %s302, 1
        %s573 = smul.addr %s572, 8
        %s574 = scalar_lea.vmem [#allocation20], %s573
        %s575 = smul.u32 2, %s40
        %s576 = smul.u32 2, %s40
        %s577 = smul.u32 2, %s40
        %v578 = vld [vmem:[%s486] sm:$0xff]
        %v579 = vld [vmem:[%s495] sm:$0xff]
        %v580 = vld [vmem:[#allocation7] sm:$0xff]
        %v581 = vld [vmem:[#allocation8] sm:$0xff]
        %583 = vset.pattern.permute.xlu0 0
        %584 = vperm.xlu0 %583, %v581
        %v585 = vpop.permute.xlu0 %584
        %v588 = vcombine.high %v578, %v578
        %vm589 = vcmask 31744
        %v591 = vsel %vm589, %v580, 0
        %vm593 = vcmask 1043456
        %v594 = vsel %vm593, %v578, 0
        %v596 = vsel %vm593, %v588, 0
        %598 = vmatprep.subr.mxu0 %v596
        %599 = vmatpush1.msra.mxu0 %v594
        %600 = vmatprep.subr.mxu0 0.0
        %601 = vmatpush1.msra.mxu0 0.0
        %602 = vmatprep.subr.mxu0 0.0
        %603 = vmatpush1.msra.mxu0 0.0
        %604 = vmatprep.subr.mxu0 0.0
        %605 = vmatpush1.msra.mxu0 0.0
        %606 = vmatprep.subr.mxu0 0.0
        %607 = vmatpush1.msra.mxu0 0.0
        %608 = vmatprep.subr.mxu0 0.0
        %609 = vmatpush1.msra.mxu0 0.0
        %610 = vmatprep.subr.mxu0 0.0
        %611 = vmatpush1.msra.mxu0 0.0
        %612 = vmatprep.subr.mxu0 0.0
        %613 = vmatpush1.msra.mxu0 0.0
        %614 = vmatprep.subr.mxu0 0.0
        %615 = vmatpush1.msra.mxu0 0.0
        %616 = vmatprep.subr.mxu0 0.0
        %617 = vmatpush1.msra.mxu0 0.0
        %618 = vmatprep.subr.mxu0 0.0
        %619 = vmatpush1.msra.mxu0 0.0
        %620 = vmatprep.subr.mxu0 0.0
        %621 = vmatpush1.msra.mxu0 0.0
        %622 = vmatprep.subr.mxu0 0.0
        %623 = vmatpush1.msra.mxu0 0.0
        %624 = vmatprep.subr.mxu0 0.0
        %625 = vmatpush1.msra.mxu0 0.0
        %626 = vmatprep.subr.mxu0 0.0
        %627 = vmatpush1.msra.mxu0 0.0
        %628 = vmatprep.subr.mxu0 0.0
        %629 = vmatpush1.msra.mxu0 0.0
        %630 = vmatprep.subr.mxu0 0.0
        %631 = vmatpush1.msra.mxu0 0.0
        %632 = vmatprep.subr.mxu0 0.0
        %633 = vmatpush1.msra.mxu0 0.0
        %634 = vmatprep.subr.mxu0 0.0
        %635 = vmatpush1.msra.mxu0 0.0
        %636 = vmatprep.subr.mxu0 0.0
        %637 = vmatpush1.msra.mxu0 0.0
        %638 = vmatprep.subr.mxu0 0.0
        %639 = vmatpush1.msra.mxu0 0.0
        %640 = vmatprep.subr.mxu0 0.0
        %641 = vmatpush1.msra.mxu0 0.0
        %642 = vmatprep.subr.mxu0 0.0
        %643 = vmatpush1.msra.mxu0 0.0
        %644 = vmatprep.subr.mxu0 0.0
        %645 = vmatpush1.msra.mxu0 0.0
        %646 = vmatprep.subr.mxu0 0.0
        %647 = vmatpush1.msra.mxu0 0.0
        %648 = vmatprep.subr.mxu0 0.0
        %649 = vmatpush1.msra.mxu0 0.0
        %650 = vmatprep.subr.mxu0 0.0
        %651 = vmatpush1.msra.mxu0 0.0
        %652 = vmatprep.subr.mxu0 0.0
        %653 = vmatpush1.msra.mxu0 0.0
        %654 = vmatprep.subr.mxu0 0.0
        %655 = vmatpush1.msra.mxu0 0.0
        %656 = vmatprep.subr.mxu0 0.0
        %657 = vmatpush1.msra.mxu0 0.0
        %658 = vmatprep.subr.mxu0 0.0
        %659 = vmatpush1.msra.mxu0 0.0
        %660 = vmatprep.subr.mxu0 0.0
        %661 = vmatpush1.msra.mxu0 0.0
        %662 = vmatprep.mubr.f32.mxu0 0.0
        %663 = vmatmul.mubr.f32.gmra.mrb[0].mxu0 %v591
        %v664 = vpop.f32.mrb[0].mxu0
        %v665 = vadd.f32 %v585, %v664
        %v666 = vpop.f32.mrb[0].mxu0
        %v667 = vadd.f32 %v585, %v666
        %668 = vdwg.mxu0
        %v669 = vmax.f32 %v665, 0.0
        %v670 = vmax.f32 %v667, 0.0
        %v671 = vld [vmem:[#allocation10] sm:$0xff]
        %v672 = vld [vmem:[#allocation11] sm:$0xff]
        %674 = vset.pattern.permute.xlu0 0
        %675 = vperm.xlu0 %674, %v672
        %v676 = vpop.permute.xlu0 %675
        %v679 = vcombine.high %v579, %v579
        %v681 = vsel %vm589, %v671, 0
        %v683 = vsel %vm593, %v579, 0
        %v685 = vsel %vm593, %v679, 0
        %687 = vmatprep.subr.mxu0 %v685
        %688 = vmatpush1.msra.mxu0 %v683
        %689 = vmatprep.subr.mxu0 0.0
        %690 = vmatpush1.msra.mxu0 0.0
        %691 = vmatprep.subr.mxu0 0.0
        %692 = vmatpush1.msra.mxu0 0.0
        %693 = vmatprep.subr.mxu0 0.0
        %694 = vmatpush1.msra.mxu0 0.0
        %695 = vmatprep.subr.mxu0 0.0
        %696 = vmatpush1.msra.mxu0 0.0
        %697 = vmatprep.subr.mxu0 0.0
        %698 = vmatpush1.msra.mxu0 0.0
        %699 = vmatprep.subr.mxu0 0.0
        %700 = vmatpush1.msra.mxu0 0.0
        %701 = vmatprep.subr.mxu0 0.0
        %702 = vmatpush1.msra.mxu0 0.0
        %703 = vmatprep.subr.mxu0 0.0
        %704 = vmatpush1.msra.mxu0 0.0
        %705 = vmatprep.subr.mxu0 0.0
        %706 = vmatpush1.msra.mxu0 0.0
        %707 = vmatprep.subr.mxu0 0.0
        %708 = vmatpush1.msra.mxu0 0.0
        %709 = vmatprep.subr.mxu0 0.0
        %710 = vmatpush1.msra.mxu0 0.0
        %711 = vmatprep.subr.mxu0 0.0
        %712 = vmatpush1.msra.mxu0 0.0
        %713 = vmatprep.subr.mxu0 0.0
        %714 = vmatpush1.msra.mxu0 0.0
        %715 = vmatprep.subr.mxu0 0.0
        %716 = vmatpush1.msra.mxu0 0.0
        %717 = vmatprep.subr.mxu0 0.0
        %718 = vmatpush1.msra.mxu0 0.0
        %719 = vmatprep.subr.mxu0 0.0
        %720 = vmatpush1.msra.mxu0 0.0
        %721 = vmatprep.subr.mxu0 0.0
        %722 = vmatpush1.msra.mxu0 0.0
        %723 = vmatprep.subr.mxu0 0.0
        %724 = vmatpush1.msra.mxu0 0.0
        %725 = vmatprep.subr.mxu0 0.0
        %726 = vmatpush1.msra.mxu0 0.0
        %727 = vmatprep.subr.mxu0 0.0
        %728 = vmatpush1.msra.mxu0 0.0
        %729 = vmatprep.subr.mxu0 0.0
        %730 = vmatpush1.msra.mxu0 0.0
        %731 = vmatprep.subr.mxu0 0.0
        %732 = vmatpush1.msra.mxu0 0.0
        %733 = vmatprep.subr.mxu0 0.0
        %734 = vmatpush1.msra.mxu0 0.0
        %735 = vmatprep.subr.mxu0 0.0
        %736 = vmatpush1.msra.mxu0 0.0
        %737 = vmatprep.subr.mxu0 0.0
        %738 = vmatpush1.msra.mxu0 0.0
        %739 = vmatprep.subr.mxu0 0.0
        %740 = vmatpush1.msra.mxu0 0.0
        %741 = vmatprep.subr.mxu0 0.0
        %742 = vmatpush1.msra.mxu0 0.0
        %743 = vmatprep.subr.mxu0 0.0
        %744 = vmatpush1.msra.mxu0 0.0
        %745 = vmatprep.subr.mxu0 0.0
        %746 = vmatpush1.msra.mxu0 0.0
        %747 = vmatprep.subr.mxu0 0.0
        %748 = vmatpush1.msra.mxu0 0.0
        %749 = vmatprep.subr.mxu0 0.0
        %750 = vmatpush1.msra.mxu0 0.0
        %751 = vmatprep.mubr.f32.mxu0 0.0
        %752 = vmatmul.mubr.f32.gmra.mrb[0].mxu0 %v681
        %v753 = vpop.f32.mrb[0].mxu0
        %v754 = vadd.f32 %v676, %v753
        %v755 = vpop.f32.mrb[0].mxu0
        %v756 = vadd.f32 %v676, %v755
        %757 = vdwg.mxu0
        %v758 = vmax.f32 %v754, 0.0
        %v759 = vmax.f32 %v756, 0.0
        %v760 = vld [vmem:[#allocation13] sm:$0x3]
        %v761 = vld [vmem:[#allocation14] sm:$0x3]
        %vm762 = vcmask 64512
        %v764 = vsel %vm762, %v761, 0
        %766 = vmatprep.subr.mxu0 %v759
        %767 = vmatpush1.msra.mxu0 %v758
        %768 = vmatprep.subr.mxu0 0.0
        %769 = vmatpush1.msra.mxu0 0.0
        %770 = vmatprep.subr.mxu0 0.0
        %771 = vmatpush1.msra.mxu0 0.0
        %772 = vmatprep.subr.mxu0 0.0
        %773 = vmatpush1.msra.mxu0 0.0
        %774 = vmatprep.subr.mxu0 0.0
        %775 = vmatpush1.msra.mxu0 0.0
        %776 = vmatprep.subr.mxu0 0.0
        %777 = vmatpush1.msra.mxu0 0.0
        %778 = vmatprep.subr.mxu0 0.0
        %779 = vmatpush1.msra.mxu0 0.0
        %780 = vmatprep.subr.mxu0 0.0
        %781 = vmatpush1.msra.mxu0 0.0
        %782 = vmatprep.subr.mxu0 0.0
        %783 = vmatpush1.msra.mxu0 0.0
        %784 = vmatprep.subr.mxu0 0.0
        %785 = vmatpush1.msra.mxu0 0.0
        %786 = vmatprep.subr.mxu0 0.0
        %787 = vmatpush1.msra.mxu0 0.0
        %788 = vmatprep.subr.mxu0 0.0
        %789 = vmatpush1.msra.mxu0 0.0
        %790 = vmatprep.subr.mxu0 0.0
        %791 = vmatpush1.msra.mxu0 0.0
        %792 = vmatprep.subr.mxu0 0.0
        %793 = vmatpush1.msra.mxu0 0.0
        %794 = vmatprep.subr.mxu0 0.0
        %795 = vmatpush1.msra.mxu0 0.0
        %796 = vmatprep.subr.mxu0 0.0
        %797 = vmatpush1.msra.mxu0 0.0
        %798 = vmatprep.subr.mxu0 0.0
        %799 = vmatpush1.msra.mxu0 0.0
        %800 = vmatprep.subr.mxu0 0.0
        %801 = vmatpush1.msra.mxu0 0.0
        %802 = vmatprep.subr.mxu0 0.0
        %803 = vmatpush1.msra.mxu0 0.0
        %804 = vmatprep.subr.mxu0 0.0
        %805 = vmatpush1.msra.mxu0 0.0
        %806 = vmatprep.subr.mxu0 0.0
        %807 = vmatpush1.msra.mxu0 0.0
        %808 = vmatprep.subr.mxu0 0.0
        %809 = vmatpush1.msra.mxu0 0.0
        %810 = vmatprep.subr.mxu0 0.0
        %811 = vmatpush1.msra.mxu0 0.0
        %812 = vmatprep.subr.mxu0 0.0
        %813 = vmatpush1.msra.mxu0 0.0
        %814 = vmatprep.subr.mxu0 0.0
        %815 = vmatpush1.msra.mxu0 0.0
        %816 = vmatprep.subr.mxu0 0.0
        %817 = vmatpush1.msra.mxu0 0.0
        %818 = vmatprep.subr.mxu0 0.0
        %819 = vmatpush1.msra.mxu0 0.0
        %820 = vmatprep.subr.mxu0 0.0
        %821 = vmatpush1.msra.mxu0 0.0
        %822 = vmatprep.subr.mxu0 0.0
        %823 = vmatpush1.msra.mxu0 0.0
        %824 = vmatprep.subr.mxu0 0.0
        %825 = vmatpush1.msra.mxu0 0.0
        %826 = vmatprep.subr.mxu0 0.0
        %827 = vmatpush1.msra.mxu0 0.0
        %828 = vmatprep.subr.mxu0 0.0
        %829 = vmatpush1.msra.mxu0 0.0
        %830 = vmatprep.mubr.f32.mxu0 0.0
        %831 = vmatmul.mubr.f32.gmra.mrb[0].mxu0 %v764
        %v832 = vpop.f32.mrb[0].mxu0
        %v833 = vadd.f32 0.0, %v832
        %v834 = vpop.f32.mrb[0].mxu0
        %v835 = vadd.f32 0.0, %v834
        %836 = vdwg.mxu0
        %v838 = vsel %vm762, %v760, 0
        %840 = vmatprep.subr.mxu0 %v670
        %841 = vmatpush1.msra.mxu0 %v669
        %842 = vmatprep.subr.mxu0 0.0
        %843 = vmatpush1.msra.mxu0 0.0
        %844 = vmatprep.subr.mxu0 0.0
        %845 = vmatpush1.msra.mxu0 0.0
        %846 = vmatprep.subr.mxu0 0.0
        %847 = vmatpush1.msra.mxu0 0.0
        %848 = vmatprep.subr.mxu0 0.0
        %849 = vmatpush1.msra.mxu0 0.0
        %850 = vmatprep.subr.mxu0 0.0
        %851 = vmatpush1.msra.mxu0 0.0
        %852 = vmatprep.subr.mxu0 0.0
        %853 = vmatpush1.msra.mxu0 0.0
        %854 = vmatprep.subr.mxu0 0.0
        %855 = vmatpush1.msra.mxu0 0.0
        %856 = vmatprep.subr.mxu0 0.0
        %857 = vmatpush1.msra.mxu0 0.0
        %858 = vmatprep.subr.mxu0 0.0
        %859 = vmatpush1.msra.mxu0 0.0
        %860 = vmatprep.subr.mxu0 0.0
        %861 = vmatpush1.msra.mxu0 0.0
        %862 = vmatprep.subr.mxu0 0.0
        %863 = vmatpush1.msra.mxu0 0.0
        %864 = vmatprep.subr.mxu0 0.0
        %865 = vmatpush1.msra.mxu0 0.0
        %866 = vmatprep.subr.mxu0 0.0
        %867 = vmatpush1.msra.mxu0 0.0
        %868 = vmatprep.subr.mxu0 0.0
        %869 = vmatpush1.msra.mxu0 0.0
        %870 = vmatprep.subr.mxu0 0.0
        %871 = vmatpush1.msra.mxu0 0.0
        %872 = vmatprep.subr.mxu0 0.0
        %873 = vmatpush1.msra.mxu0 0.0
        %874 = vmatprep.subr.mxu0 0.0
        %875 = vmatpush1.msra.mxu0 0.0
        %876 = vmatprep.subr.mxu0 0.0
        %877 = vmatpush1.msra.mxu0 0.0
        %878 = vmatprep.subr.mxu0 0.0
        %879 = vmatpush1.msra.mxu0 0.0
        %880 = vmatprep.subr.mxu0 0.0
        %881 = vmatpush1.msra.mxu0 0.0
        %882 = vmatprep.subr.mxu0 0.0
        %883 = vmatpush1.msra.mxu0 0.0
        %884 = vmatprep.subr.mxu0 0.0
        %885 = vmatpush1.msra.mxu0 0.0
        %886 = vmatprep.subr.mxu0 0.0
        %887 = vmatpush1.msra.mxu0 0.0
        %888 = vmatprep.subr.mxu0 0.0
        %889 = vmatpush1.msra.mxu0 0.0
        %890 = vmatprep.subr.mxu0 0.0
        %891 = vmatpush1.msra.mxu0 0.0
        %892 = vmatprep.subr.mxu0 0.0
        %893 = vmatpush1.msra.mxu0 0.0
        %894 = vmatprep.subr.mxu0 0.0
        %895 = vmatpush1.msra.mxu0 0.0
        %896 = vmatprep.subr.mxu0 0.0
        %897 = vmatpush1.msra.mxu0 0.0
        %898 = vmatprep.subr.mxu0 0.0
        %899 = vmatpush1.msra.mxu0 0.0
        %900 = vmatprep.subr.mxu0 0.0
        %901 = vmatpush1.msra.mxu0 0.0
        %902 = vmatprep.subr.mxu0 0.0
        %903 = vmatpush1.msra.mxu0 0.0
        %904 = vmatprep.mubr.f32.mxu0 0.0
        %905 = vmatmul.mubr.f32.gmra.mrb[0].mxu0 %v838
        %v906 = vpop.f32.mrb[0].mxu0
        %v907 = vadd.f32 %v833, %v906
        %v908 = vpop.f32.mrb[0].mxu0
        %v909 = vadd.f32 %v835, %v908
        %910 = vdwg.mxu0
        %v911 = vld [vmem:[#allocation16] sm:$0x3]
        %913 = vset.pattern.permute.xlu0 0
        %914 = vperm.xlu0 %913, %v911
        %v915 = vpop.permute.xlu0 %914
        %v917 = vadd.f32 %v907, %v915
        %v918 = vadd.f32 %v909, %v915
        %v921 = vrot.slane %v917, 1
        %v922 = vrot.slane %v918, 1
        %v925 = vmax.f32 %v917, %v921
        %v926 = vmax.f32 %v918, %v922
        %v927 = vsub.f32 %v917, %v925
        %v928 = vsub.f32 %v918, %v926
        %v929 = vmul.f32 %v927, 1.442695
        %v930 = vpow.pop %v929
        %v931 = vmul.f32 %v928, 1.442695
        %v932 = vpow.pop %v931
        %v935 = vrot.slane %v925, 7
        %v936 = vrot.slane %v926, 7
        %v939 = vsub.f32 %v917, %v935
        %v940 = vsub.f32 %v918, %v936
        %v941 = vmul.f32 %v939, 1.442695
        %v942 = vpow.pop %v941
        %v943 = vmul.f32 %v940, 1.442695
        %v944 = vpow.pop %v943
        %v947 = vrot.slane %v942, 1
        %v948 = vrot.slane %v944, 1
        %v951 = vadd.f32 %v930, %v947
        %v952 = vadd.f32 %v932, %v948
        %v953 = vrcp.pop %v951
        %v954 = vrcp.pop %v952
        %v955 = vmul.f32 %v930, %v953
        %v956 = vmul.f32 %v932, %v954
        %v959 = vrot.slane %v953, 7
        %v960 = vrot.slane %v954, 7
        %v963 = vmul.f32 %v942, %v959
        %v964 = vmul.f32 %v944, %v960
        %v965 = vlaneseq
        %v966 = vshrl.u32 %v965, 7
        %v967 = vsub.s32 0, %v966
        %v968 = vrot.slane %v955, %v967
        %v969 = vlaneseq
        %v970 = vshrl.u32 %v969, 7
        %v971 = vsub.s32 0, %v970
        %v972 = vrot.slane %v956, %v971
        %v975 = vcombine.low %v968, %v972
        %v977 = vmul.f32 %v578, %v975
        %v978 = vlaneseq
        %v979 = vshrl.u32 %v978, 7
        %v980 = vsub.s32 1, %v979
        %v981 = vrot.slane %v963, %v980
        %v982 = vlaneseq
        %v983 = vshrl.u32 %v982, 7
        %v984 = vsub.s32 1, %v983
        %v985 = vrot.slane %v964, %v984
        %v988 = vcombine.low %v981, %v985
        %v990 = vmul.f32 %v579, %v988
        %v991 = vadd.f32 %v977, %v990
        %v992 = vld [vmem:[#allocation17] sm:$0xf]
        %v993 = vld [vmem:[#allocation19] sm:$0xf]
        %995 = vset.pattern.permute.xlu0 0
        %996 = vperm.xlu0 %995, %v993
        %v997 = vpop.permute.xlu0 %996
        %v1000 = vcombine.high %v991, %v991
        %v1002 = vsel %vm589, %v992, 0
        %v1004 = vsel %vm593, %v991, 0
        %v1006 = vsel %vm593, %v1000, 0
        %1008 = vmatprep.subr.mxu0 %v1006
        %1009 = vmatpush1.msra.mxu0 %v1004
        %1010 = vmatprep.subr.mxu0 0.0
        %1011 = vmatpush1.msra.mxu0 0.0
        %1012 = vmatprep.subr.mxu0 0.0
        %1013 = vmatpush1.msra.mxu0 0.0
        %1014 = vmatprep.subr.mxu0 0.0
        %1015 = vmatpush1.msra.mxu0 0.0
        %1016 = vmatprep.subr.mxu0 0.0
        %1017 = vmatpush1.msra.mxu0 0.0
        %1018 = vmatprep.subr.mxu0 0.0
        %1019 = vmatpush1.msra.mxu0 0.0
        %1020 = vmatprep.subr.mxu0 0.0
        %1021 = vmatpush1.msra.mxu0 0.0
        %1022 = vmatprep.subr.mxu0 0.0
        %1023 = vmatpush1.msra.mxu0 0.0
        %1024 = vmatprep.subr.mxu0 0.0
        %1025 = vmatpush1.msra.mxu0 0.0
        %1026 = vmatprep.subr.mxu0 0.0
        %1027 = vmatpush1.msra.mxu0 0.0
        %1028 = vmatprep.subr.mxu0 0.0
        %1029 = vmatpush1.msra.mxu0 0.0
        %1030 = vmatprep.subr.mxu0 0.0
        %1031 = vmatpush1.msra.mxu0 0.0
        %1032 = vmatprep.subr.mxu0 0.0
        %1033 = vmatpush1.msra.mxu0 0.0
        %1034 = vmatprep.subr.mxu0 0.0
        %1035 = vmatpush1.msra.mxu0 0.0
        %1036 = vmatprep.subr.mxu0 0.0
        %1037 = vmatpush1.msra.mxu0 0.0
        %1038 = vmatprep.subr.mxu0 0.0
        %1039 = vmatpush1.msra.mxu0 0.0
        %1040 = vmatprep.subr.mxu0 0.0
        %1041 = vmatpush1.msra.mxu0 0.0
        %1042 = vmatprep.subr.mxu0 0.0
        %1043 = vmatpush1.msra.mxu0 0.0
        %1044 = vmatprep.subr.mxu0 0.0
        %1045 = vmatpush1.msra.mxu0 0.0
        %1046 = vmatprep.subr.mxu0 0.0
        %1047 = vmatpush1.msra.mxu0 0.0
        %1048 = vmatprep.subr.mxu0 0.0
        %1049 = vmatpush1.msra.mxu0 0.0
        %1050 = vmatprep.subr.mxu0 0.0
        %1051 = vmatpush1.msra.mxu0 0.0
        %1052 = vmatprep.subr.mxu0 0.0
        %1053 = vmatpush1.msra.mxu0 0.0
        %1054 = vmatprep.subr.mxu0 0.0
        %1055 = vmatpush1.msra.mxu0 0.0
        %1056 = vmatprep.subr.mxu0 0.0
        %1057 = vmatpush1.msra.mxu0 0.0
        %1058 = vmatprep.subr.mxu0 0.0
        %1059 = vmatpush1.msra.mxu0 0.0
        %1060 = vmatprep.subr.mxu0 0.0
        %1061 = vmatpush1.msra.mxu0 0.0
        %1062 = vmatprep.subr.mxu0 0.0
        %1063 = vmatpush1.msra.mxu0 0.0
        %1064 = vmatprep.subr.mxu0 0.0
        %1065 = vmatpush1.msra.mxu0 0.0
        %1066 = vmatprep.subr.mxu0 0.0
        %1067 = vmatpush1.msra.mxu0 0.0
        %1068 = vmatprep.subr.mxu0 0.0
        %1069 = vmatpush1.msra.mxu0 0.0
        %1070 = vmatprep.subr.mxu0 0.0
        %1071 = vmatpush1.msra.mxu0 0.0
        %1072 = vmatprep.mubr.f32.mxu0 0.0
        %1073 = vmatmul.mubr.f32.gmra.mrb[0].mxu0 %v1002
        %v1074 = vpop.f32.mrb[0].mxu0
        %v1075 = vadd.f32 %v997, %v1074
        %v1076 = vpop.f32.mrb[0].mxu0
        %v1077 = vadd.f32 %v997, %v1076
        %1078 = vdwg.mxu0
        %v1079 = vmax.f32 %v1075, 0.0
        %v1080 = vmax.f32 %v1077, 0.0
        %v1083 = vcombine.low %v1079, %v1080
        %1085 = vst [vmem:[%s574] sm:$0xff] %v1083
        %s1086 = sand.u32 %s302, 1
        %s1087 = scalar_lea.sflag [#allocation4], %s1086
        %s1088 = sand.u32 %s302, 1
        %s1089 = smul.addr %s1088, 8
        %s1090 = scalar_lea.vmem [#allocation20], %s1089
        // Predicated region
        $region109: #{tpu_custom_call.1} parent=63 // pred_check
          %p1091 = pneg %p312
        $region110: #{tpu_custom_call.1} parent=63 // pred_check_branch
          %1093 = sbr.rel (%p1091) target = $region112
        $region111: #{tpu_custom_call.1} parent=63 // pred_region
          %s1094 = smul.u32 2, %s40
          %s1096 = ssub.s32 128, 128
          %1097 = vsyncadd %s1087, %s1096
          %s1098 = smul.addr %s39, 2
          %s1099 = sadd.s32 %s1094, %s1098
          %s1100 = smul.addr %s1099, 64
          %s1101 = scalar_lea.hbm %s11, %s1100
          %s1103 = sshll.u32 %s1090, 4
          %s1104 = int_to_ptr.vmem [resolvable:$true] %s1103
          %1106 = dma.vmem_to_hbm [thread:$0]  %s1104, 128, %s1101, %s1087
        $region112: #{tpu_custom_call.1} parent=63 // pred_fallthru
          _
      $region64: #{tpu_custom_call.1} parent=5 // pred_fallthru
        _
      %p1107 = scmp.le.s32.totalorder 2, %s30
      // Predicated region
      $region113: #{tpu_custom_call.1} parent=5 // pred_check
        %p1108 = pneg %p1107
      $region114: #{tpu_custom_call.1} parent=5 // pred_check_branch
        %1110 = sbr.rel (%p1108) target = $region116
      $region115: #{tpu_custom_call.1} parent=5 // pred_region
        %s1111 = ssub.s32 %s30, 2
        // Predicated region
        $region117: #{tpu_custom_call.1} parent=115 // pred_check
          %p1112 = pneg %p318
        $region118: #{tpu_custom_call.1} parent=115 // pred_check_branch
          %1114 = sbr.rel (%p1112) target = $region120
        $region119: #{tpu_custom_call.1} parent=115 // pred_region
          %s1115 = sand.u32 %s303, 1
          %s1116 = scalar_lea.sflag [#allocation4], %s1115
          %s1117 = sand.u32 %s303, 1
          %s1118 = smul.addr %s1117, 8
          %s1119 = scalar_lea.vmem [#allocation20], %s1118
          %1120 = dma.done %s1116, 128
        $region120: #{tpu_custom_call.1} parent=115 // pred_fallthru
          _
      $region116: #{tpu_custom_call.1} parent=5 // pred_fallthru
        _
    $region6: #{tpu_custom_call.1} parent=1 // loop_footer
      %s34 = sadd.s32 1, %s30
    $region7: #{tpu_custom_call.1} parent=1 // loop_footer_branch
      %29 = sbr.rel target = $region3
    $region8: #{tpu_custom_call.1} parent=1 // loop_exit
      _
    %1121 = vsyncpa [#allocation3], 1
    %s1122 = scalar_lea.sflag [#allocation3], 1
    %1123 = vsyncpa %s1122, 1
    %1124 = vsyncpa [#allocation6], 1
    %s1125 = scalar_lea.sflag [#allocation6], 1
    %1126 = vsyncpa %s1125, 1
    %1127 = vsyncpa [#allocation9], 1
    %1128 = vsyncpa [#allocation12], 1
    %1129 = vsyncpa [#allocation15], 1
    %1130 = vsyncpa [#allocation18], 1
    %1131 = vsyncpa [#allocation4], 1
    %s1132 = scalar_lea.sflag [#allocation4], 1
    %1133 = vsyncpa %s1132, 1

</llo_original>
